<compile_context>
chip_gen: v7x
topology: tpu7x:2x2x1
jax: 0.10.0
libtpu: 0.0.40
codegen_flags: <defaults>
</compile_context>

<pallas_src>
import functools
import math

import jax
import jax.numpy as jnp
from jax.experimental import pallas as pl
from jax.experimental.pallas import tpu as pltpu

_MIB = 1024 * 1024


# ----------------------------------------------------------------------------
# helpers
# ----------------------------------------------------------------------------
def _round_up(x, m):
    return ((x + m - 1) // m) * m


def _pad2(x, rows, cols):
    r, c = x.shape
    return jnp.pad(x, ((0, rows - r), (0, cols - c)))


@functools.lru_cache(maxsize=1)
def _vmem_capacity_bytes():
    """Physical per-core VMEM, used to size per-generation scoped limits."""
    try:
        return int(pltpu.get_tpu_info().vmem_capacity_bytes)
    except Exception:
        pass
    try:
        kind = jax.devices()[0].device_kind.lower()
    except Exception:
        kind = ""
    if ("v4" in kind) or ("v5" in kind) or ("v6" in kind):
        return 128 * _MIB
    return 64 * _MIB  # conservative default (v7x has 64 MiB per TensorCore)


def _vmem_limit_bytes():
    cap = _vmem_capacity_bytes()
    # ~112 MiB on 128-MiB chips (v5e/v6e), ~48 MiB on 64-MiB chips (v7x).
    return int(min(cap - 16 * _MIB, 112 * _MIB))


def _choose_base_tile(dim, cap=2048):
    """Tile (multiple of 128, <= cap) the padded dim will be a multiple of."""
    d128 = _round_up(max(dim, 1), 128)
    if d128 <= cap:
        return d128  # a single tile covers the whole (128-rounded) dim
    best = 128
    for c in (256, 512, 1024, 2048):
        if c > cap:
            break
        if _round_up(dim, c) - d128 <= d128 // 8:  # <= 12.5% padding waste
            best = c
    return best


def _divisor_tile(dim, cap=2048):
    """Largest multiple of 128 dividing `dim` (itself a 128-multiple), <= cap."""
    t = max(128, (min(dim, cap) // 128) * 128)
    while dim % t != 0:
        t -= 128
    return t


# ----------------------------------------------------------------------------
# Kernel 1: tiled matmul + in-place running-sum accumulate
#   y       = A @ x                       (bf16, feeds the next hop)
#   sum_out = (sum_in + A @ x) * scale    (f32, running mean of hop embeddings)
# ----------------------------------------------------------------------------
def matmul_accum_kernel(a_ref, x_ref, sum_ref, y_ref, sum_out_ref, acc_ref,
                        *, scale, tk, x_resident):
    k = pl.program_id(1)

    @pl.when(k == 0)
    def _():
        acc_ref[...] = jnp.zeros_like(acc_ref)

    if x_resident:
        # x is resident in VMEM (constant index_map); slice the k-chunk here.
        start = pl.multiple_of(k * tk, 128)
        x_blk = x_ref[pl.ds(start, tk), :]
    else:
        x_blk = x_ref[...]

    acc_ref[...] += jnp.dot(a_ref[...], x_blk,
                            preferred_element_type=jnp.float32)

    @pl.when(k == pl.num_programs(1) - 1)
    def _():
        acc = acc_ref[...]
        # Next-hop input is re-derived from the f32 accumulator (single bf16
        # rounding per hop).
        y_ref[...] = acc.astype(y_ref.dtype)
        s = sum_ref[...] + acc
        if scale != 1.0:
            s = s * scale
        sum_out_ref[...] = s


def tiled_matmul_accum(a_bf16, x_bf16, sum_f32, *, scale=1.0):
    """a: (M,K) bf16, x: (K,d) bf16, sum: (M,d) f32; M,K,d multiples of 128."""
    m, k = a_bf16.shape
    kx, d = x_bf16.shape
    assert kx == k and sum_f32.shape == (m, d)

    budget = _vmem_capacity_bytes() - 16 * _MIB

    # Per-row bytes of the (tm, d) in/out tiles + accumulator:
    #   2x f32 sum_in + 2x bf16 y + 2x f32 sum_out (double-buffered) + f32 acc.
    per_row_io = 24 * d
    tm_cap = max(128, ((budget // 2) // per_row_io) // 128 * 128)
    tm = _divisor_tile(m, cap=min(2048, tm_cap))
    # v7x megacore: keep >= 2 blocks along the parallel i-axis when possible.
    while m // tm < 2 and tm > 128 and (tm // 2) % 128 == 0 and m % (tm // 2) == 0:
        tm //= 2

    # A tile is bf16 double-buffered (4*tm bytes per k column); tiled x adds
    # 4*d bytes per k row.
    tk_cap = max(128, ((budget - tm * per_row_io) // (4 * tm + 4 * d)) // 128 * 128)
    tk = _divisor_tile(k, cap=min(2048, tk_cap))

    # Resident x removes the (M/tm)-fold re-stream of x when it fits VMEM.
    x_resident = (tm * per_row_io + 4 * tm * tk + 4 * k * d) <= budget

    grid = (m // tm, k // tk)  # reduction axis last

    kernel = functools.partial(matmul_accum_kernel, scale=float(scale),
                               tk=tk, x_resident=x_resident)
    if x_resident:
        x_spec = pl.BlockSpec((k, d), lambda i, kk: (0, 0))    # fetched once
    else:
        x_spec = pl.BlockSpec((tk, d), lambda i, kk: (kk, 0))  # streamed per k

    y, new_sum = pl.pallas_call(
        kernel,
        out_shape=(jax.ShapeDtypeStruct((m, d), jnp.bfloat16),
                   jax.ShapeDtypeStruct((m, d), jnp.float32)),
        grid_spec=pltpu.PrefetchScalarGridSpec(
            num_scalar_prefetch=0,
            grid=grid,
            in_specs=[
                pl.BlockSpec((tm, tk), lambda i, kk: (i, kk)),  # A tile
                x_spec,                                          # x
                pl.BlockSpec((tm, d), lambda i, kk: (i, 0)),     # running sum in
            ],
            out_specs=[
                pl.BlockSpec((tm, d), lambda i, kk: (i, 0)),     # y (next hop)
                pl.BlockSpec((tm, d), lambda i, kk: (i, 0)),     # running sum out
            ],
            scratch_shapes=[pltpu.VMEM((tm, d), jnp.float32)],   # f32 accumulator
        ),
        # Update the (M, d) f32 running sum in place (input 2 -> output 1).
        input_output_aliases={2: 1},
        compiler_params=pltpu.CompilerParams(
            dimension_semantics=("parallel", "arbitrary"),
            vmem_limit_bytes=_vmem_limit_bytes(),
        ),
    )(a_bf16, x_bf16, sum_f32)
    return y, new_sum


# ----------------------------------------------------------------------------
# Kernel 2: scoring, gridded over batch, lane-dense padded-K output
#   scores[b, k] = sum_d user_emb[b, 0, d] * item_emb[b, k, d] / temperature
# ----------------------------------------------------------------------------
def score_kernel(u_ref, it_ref, o_ref, *, inv_temperature):
    u = u_ref[...].astype(jnp.float32)    # (Bt, 1, d_pad)
    it = it_ref[...].astype(jnp.float32)  # (Bt, K_pad, d_pad)
    o_ref[...] = jnp.sum(u * it, axis=-1) * inv_temperature


def lightgcn_score(user_embs, item_embs, temperature):
    b, one, d = user_embs.shape
    _, kk, _ = item_embs.shape
    k_pad = _round_up(kk, 128)  # lane-dense output (unmasked vst)

    # Batch tile: bounded so the (Bt, K_pad, d) item block stays small in VMEM.
    bt_budget = max(8, ((16 * _MIB) // (2 * k_pad * d * 4)) // 8 * 8)
    bt = max(8, min(128, _round_up(b, 8), bt_budget))
    b_pad = _round_up(b, bt)

    u_p = jnp.pad(user_embs, ((0, b_pad - b), (0, 0), (0, 0)))
    it_p = jnp.pad(item_embs, ((0, b_pad - b), (0, k_pad - kk), (0, 0)))

    kernel = functools.partial(score_kernel,
                               inv_temperature=1.0 / float(temperature))
    out = pl.pallas_call(
        kernel,
        out_shape=jax.ShapeDtypeStruct((b_pad, k_pad), jnp.float32),
        grid=(b_pad // bt,),
        in_specs=[
            pl.BlockSpec((bt, one, d), lambda i: (i, 0, 0)),
            pl.BlockSpec((bt, k_pad, d), lambda i: (i, 0, 0)),
        ],
        out_specs=pl.BlockSpec((bt, k_pad), lambda i: (i, 0)),
        compiler_params=pltpu.CompilerParams(
            dimension_semantics=("parallel",)),
    )(u_p, it_p)
    return out[:b, :kk]


# ----------------------------------------------------------------------------
# Jitted multi-hop propagation (the hop dependency is sequential; each hop's
# matmul gets the full pipelining budget).
# ----------------------------------------------------------------------------
def _propagate_bipartite(R_p, RT_p, u0, i0, hop):
    scale_last = 1.0 / float(hop + 1)
    u_sum, i_sum = u0, i0
    u_cur = u0.astype(jnp.bfloat16)
    i_cur = i0.astype(jnp.bfloat16)
    for h in range(hop):
        scale = scale_last if h == hop - 1 else 1.0
        u_next, u_sum = tiled_matmul_accum(R_p, i_cur, u_sum, scale=scale)
        i_next, i_sum = tiled_matmul_accum(RT_p, u_cur, i_sum, scale=scale)
        u_cur, i_cur = u_next, i_next
    return u_sum, i_sum


_propagate_bipartite = jax.jit(_propagate_bipartite, static_argnames=("hop",))


def _propagate_dense(A_p, x0, hop):
    scale_last = 1.0 / float(hop + 1)
    s = x0
    cur = x0.astype(jnp.bfloat16)
    for h in range(hop):
        scale = scale_last if h == hop - 1 else 1.0
        cur, s = tiled_matmul_accum(A_p, cur, s, scale=scale)
    return s


_propagate_dense = jax.jit(_propagate_dense, static_argnames=("hop",))


# ----------------------------------------------------------------------------
# LightGCN wrapper (index gathers stay in plain JAX glue)
# ----------------------------------------------------------------------------
class LightGCNPallas:
    def __init__(self, num_users, num_items, dim, hop, temperature, g_laplace):
        self.num_users = num_users
        self.num_items = num_items
        self.dim = dim
        self.hop = hop
        self.temperature = temperature
        self.g_laplace = g_laplace  # dense (N, N); kept for reference/fallback

        # Deterministic xavier_normal_ init (std = sqrt(2 / (fan_in + fan_out)))
        key = jax.random.PRNGKey(0)
        ku, ki = jax.random.split(key)
        std_u = math.sqrt(2.0 / (num_users + dim))
        std_i = math.sqrt(2.0 / (num_items + dim))
        self.user_emb = std_u * jax.random.normal(ku, (num_users, dim), jnp.float32)
        self.item_emb = std_i * jax.random.normal(ki, (num_items, dim), jnp.float32)

        self.d_pad = _round_up(dim, 128)
        u, it = num_users, num_items

        # Tolerance-based bipartite detection (robust to numerical noise).
        g_abs_max = float(jnp.max(jnp.abs(g_laplace)))
        tol = 1e-6 * max(g_abs_max, 1e-30)
        uu_max = float(jnp.max(jnp.abs(g_laplace[:u, :u])))
        ii_max = float(jnp.max(jnp.abs(g_laplace[u:, u:])))
        self.bipartite = (uu_max <= tol) and (ii_max <= tol)

        if self.bipartite:
            tu = _choose_base_tile(u)
            ti = _choose_base_tile(it)
            self.u_pad = _round_up(u, tu)
            self.i_pad = _round_up(it, ti)
            self.R_p = _pad2(g_laplace[:u, u:], self.u_pad, self.i_pad).astype(jnp.bfloat16)
            self.RT_p = _pad2(g_laplace[u:, :u], self.i_pad, self.u_pad).astype(jnp.bfloat16)
        else:
            n = u + it
            tn = _choose_base_tile(n)
            self.n_pad = _round_up(n, tn)
            self.A_p = _pad2(g_laplace, self.n_pad, self.n_pad).astype(jnp.bfloat16)

        # Propagation cache (valid until embeddings / graph change).
        self._users_p = None
        self._items_p = None

    def _propagated(self):
        if self._users_p is None:
            d_pad = self.d_pad
            if self.bipartite:
                u0 = _pad2(self.user_emb, self.u_pad, d_pad)
                i0 = _pad2(self.item_emb, self.i_pad, d_pad)
                if self.hop == 0:
                    self._users_p, self._items_p = u0, i0
                else:
                    self._users_p, self._items_p = _propagate_bipartite(
                        self.R_p, self.RT_p, u0, i0, hop=self.hop)
            else:
                x0 = _pad2(jnp.concatenate([self.user_emb, self.item_emb], axis=0),
                           self.n_pad, d_pad)
                s = x0 if self.hop == 0 else _propagate_dense(self.A_p, x0, hop=self.hop)
                self._users_p = s[: self.num_users]
                self._items_p = s[self.num_users: self.num_users + self.num_items]
        return self._users_p, self._items_p

    def computer(self):
        users_p, items_p = self._propagated()
        return (users_p[: self.num_users, : self.dim],
                items_p[: self.num_items, : self.dim])

    def forward(self, batch):
        # batch: (B, 1+K) int32; column 0 = user index, columns 1: = item indices.
        users_p, items_p = self._propagated()        # cached across calls
        user_embs = users_p[batch[:, 0:1]]           # (B, 1, d_pad), plain-JAX gather
        item_embs = items_p[batch[:, 1:]]            # (B, K, d_pad)
        return lightgcn_score(user_embs, item_embs, self.temperature)  # (B, K)


# ----------------------------------------------------------------------------
# Deterministic synthetic graph Laplacian (symmetric-normalized bipartite adj)
# ----------------------------------------------------------------------------
def build_laplacian(num_users, num_items, key):
    n = num_users + num_items
    r = (jax.random.uniform(key, (num_users, num_items)) < 0.3).astype(jnp.float32)
    adj = jnp.zeros((n, n), jnp.float32)
    adj = adj.at[:num_users, num_users:].set(r)
    adj = adj.at[num_users:, :num_users].set(r.T)
    deg = jnp.maximum(adj.sum(axis=1), 1.0)
    d_inv_sqrt = 1.0 / jnp.sqrt(deg)
    return adj * d_inv_sqrt[:, None] * d_inv_sqrt[None, :]


# ----------------------------------------------------------------------------
# Reference (plain JAX, f32) for sanity check
# ----------------------------------------------------------------------------
def reference_forward(model, batch):
    all_emb = jnp.concatenate([model.user_emb, model.item_emb], axis=0)
    embs = [all_emb]
    for _ in range(model.hop):
        embs.append(model.g_laplace @ embs[-1])
    light_out = jnp.mean(jnp.stack(embs, axis=1), axis=1)
    users = light_out[: model.num_users]
    items = light_out[model.num_users:]
    u = users[batch[:, 0:1]]
    it = items[batch[:, 1:]]
    return (u * it).sum(-1) / model.temperature


if __name__ == "__main__":
    num_users, num_items, dim, hop = 24, 40, 32, 3
    temperature = 0.2
    B, K = 4, 3

    key = jax.random.PRNGKey(0)
    k_lap, k_batch_u, k_batch_i = jax.random.split(key, 3)

    g_laplace = build_laplacian(num_users, num_items, k_lap)
    model = LightGCNPallas(num_users, num_items, dim, hop, temperature, g_laplace)

    users = jax.random.randint(k_batch_u, (B, 1), 0, num_users, jnp.int32)
    items = jax.random.randint(k_batch_i, (B, K), 0, num_items, jnp.int32)
    batch = jnp.concatenate([users, items], axis=1)  # (B, 1+K)

    scores = model.forward(batch)
    scores = jax.block_until_ready(scores)

    ref = reference_forward(model, batch)
    assert scores.shape == (B, K)
    # bf16 MXU operands (f32 accumulation) -> looser tolerance vs the f32 reference.
    assert jnp.allclose(scores, ref, rtol=5e-2, atol=5e-2), (scores, ref)

    # Second forward reuses the cached propagation (only gather + score run).
    scores2 = jax.block_until_ready(model.forward(batch))
    assert jnp.allclose(scores2, scores)

    print("KERNEL_OK")
</pallas_src>

<mosaic_0001>
module attributes {stable_mosaic.version = 11 : i64} {
  func.func @matmul_accum_kernel(%arg0: i32, %arg1: i32, %arg2: memref<128x128xbf16, #tpu.memory_space<vmem>>, %arg3: memref<128x128xbf16, #tpu.memory_space<vmem>>, %arg4: memref<128x128xf32, #tpu.memory_space<vmem>>, %arg5: memref<128x128xbf16, #tpu.memory_space<vmem>>, %arg6: memref<128x128xf32, #tpu.memory_space<vmem>>, %arg7: memref<128x128xf32, #tpu.memory_space<vmem>>) attributes {dimension_semantics = [#tpu.dimension_semantics<parallel>, #tpu.dimension_semantics<arbitrary>], iteration_bounds = array<i64: 1, 1>, scalar_prefetch = 0 : i64, scratch_operands = 1 : i64, tpu.core_type = #tpu.core_type<tc>, window_params = [{transform_indices = @transform_0, window_bounds = array<i64: 128, 128>}, {pipeline_mode = #tpu.pipeline_mode<synchronous>, transform_indices = @transform_1, window_bounds = array<i64: 128, 128>}, {transform_indices = @transform_2, window_bounds = array<i64: 128, 128>}, {transform_indices = @transform_3, window_bounds = array<i64: 128, 128>}, {transform_indices = @transform_4, window_bounds = array<i64: 128, 128>}]} {
    %c0_i32 = arith.constant 0 : i32
    %0 = arith.cmpi eq, %arg1, %c0_i32 : i32
    %1 = arith.extui %0 : i1 to i32
    %c0_i32_0 = arith.constant 0 : i32
    %2 = arith.cmpi ne, %1, %c0_i32_0 : i32
    scf.if %2 {
      %cst_9 = arith.constant 0.000000e+00 : f32
      %15 = vector.broadcast %cst_9 : f32 to vector<128x128xf32>
      %c0_10 = arith.constant 0 : index
      %c0_11 = arith.constant 0 : index
      %16 = vector.load %arg7[%c0_10, %c0_11] : memref<128x128xf32, #tpu.memory_space<vmem>>, vector<128x128xf32>
      tpu.vector_store %arg7[%c0_10, %c0_11], %15 {strides = array<i32>} : memref<128x128xf32, #tpu.memory_space<vmem>>, vector<128x128xf32>,
    } else {
    }
    %c128_i32 = arith.constant 128 : i32
    %3 = arith.muli %arg1, %c128_i32 : i32
    %4 = tpu.assume_multiple %3, 128 : i32
    %5 = arith.index_cast %4 : i32 to index
    %c0 = arith.constant 0 : index
    %6 = vector.load %arg3[%5, %c0] : memref<128x128xbf16, #tpu.memory_space<vmem>>, vector<128x128xbf16>
    %c0_1 = arith.constant 0 : index
    %c0_2 = arith.constant 0 : index
    %7 = vector.load %arg7[%c0_1, %c0_2] : memref<128x128xf32, #tpu.memory_space<vmem>>, vector<128x128xf32>
    %c0_3 = arith.constant 0 : index
    %c0_4 = arith.constant 0 : index
    %8 = vector.load %arg2[%c0_3, %c0_4] : memref<128x128xbf16, #tpu.memory_space<vmem>>, vector<128x128xbf16>
    %cst = arith.constant dense<0.000000e+00> : vector<128x128xf32>
    %9 = tpu.matmul %8, %6, %cst {dimension_numbers = #tpu.dot_dimension_numbers<[1], [0], [0], [1], [0, 0, 1, 1], [], []>} : vector<128x128xbf16>, vector<128x128xbf16>, vector<128x128xf32> -> vector<128x128xf32>
    %10 = arith.addf %7, %9 : vector<128x128xf32>
    %c0_5 = arith.constant 0 : index
    %c0_6 = arith.constant 0 : index
    %11 = vector.load %arg7[%c0_5, %c0_6] : memref<128x128xf32, #tpu.memory_space<vmem>>, vector<128x128xf32>
    tpu.vector_store %arg7[%c0_5, %c0_6], %10 {strides = array<i32>} : memref<128x128xf32, #tpu.memory_space<vmem>>, vector<128x128xf32>,
    %c0_i32_7 = arith.constant 0 : i32
    %12 = arith.cmpi eq, %arg1, %c0_i32_7 : i32
    %13 = arith.extui %12 : i1 to i32
    %c0_i32_8 = arith.constant 0 : i32
    %14 = arith.cmpi ne, %13, %c0_i32_8 : i32
    scf.if %14 {
      %c0_9 = arith.constant 0 : index
      %c0_10 = arith.constant 0 : index
      %15 = vector.load %arg7[%c0_9, %c0_10] : memref<128x128xf32, #tpu.memory_space<vmem>>, vector<128x128xf32>
      %16 = arith.truncf %15 : vector<128x128xf32> to vector<128x128xbf16>
      %c0_11 = arith.constant 0 : index
      %c0_12 = arith.constant 0 : index
      %17 = vector.load %arg5[%c0_11, %c0_12] : memref<128x128xbf16, #tpu.memory_space<vmem>>, vector<128x128xbf16>
      tpu.vector_store %arg5[%c0_11, %c0_12], %16 {strides = array<i32>} : memref<128x128xbf16, #tpu.memory_space<vmem>>, vector<128x128xbf16>,
      %c0_13 = arith.constant 0 : index
      %c0_14 = arith.constant 0 : index
      %18 = vector.load %arg4[%c0_13, %c0_14] : memref<128x128xf32, #tpu.memory_space<vmem>>, vector<128x128xf32>
      %19 = arith.addf %18, %15 : vector<128x128xf32>
      %c0_15 = arith.constant 0 : index
      %c0_16 = arith.constant 0 : index
      %20 = vector.load %arg6[%c0_15, %c0_16] : memref<128x128xf32, #tpu.memory_space<vmem>>, vector<128x128xf32>
      tpu.vector_store %arg6[%c0_15, %c0_16], %19 {strides = array<i32>} : memref<128x128xf32, #tpu.memory_space<vmem>>, vector<128x128xf32>,
    } else {
    }
    return
  }
  func.func @transform_0(%arg0: i32, %arg1: i32) -> (i32, i32) {
    %c0_i32 = arith.constant 0 : i32
    return %arg0, %arg1 : i32, i32
  }
  func.func @transform_1(%arg0: i32, %arg1: i32) -> (i32, i32) {
    %c0_i32 = arith.constant 0 : i32
    %c0_i32_0 = arith.constant 0 : i32
    %c0_i32_1 = arith.constant 0 : i32
    return %c0_i32, %c0_i32_0 : i32, i32
  }
  func.func @transform_2(%arg0: i32, %arg1: i32) -> (i32, i32) {
    %c0_i32 = arith.constant 0 : i32
    %c0_i32_0 = arith.constant 0 : i32
    return %arg0, %c0_i32 : i32, i32
  }
  func.func @transform_3(%arg0: i32, %arg1: i32) -> (i32, i32) {
    %c0_i32 = arith.constant 0 : i32
    %c0_i32_0 = arith.constant 0 : i32
    return %arg0, %c0_i32 : i32, i32
  }
  func.func @transform_4(%arg0: i32, %arg1: i32) -> (i32, i32) {
    %c0_i32 = arith.constant 0 : i32
    %c0_i32_0 = arith.constant 0 : i32
    return %arg0, %c0_i32 : i32, i32
  }
}

module attributes {stable_mosaic.version = 11 : i64} {
  func.func @matmul_accum_kernel(%arg0: i32, %arg1: i32, %arg2: memref<128x128xbf16, #tpu.memory_space<vmem>>, %arg3: memref<128x128xbf16, #tpu.memory_space<vmem>>, %arg4: memref<128x128xf32, #tpu.memory_space<vmem>>, %arg5: memref<128x128xbf16, #tpu.memory_space<vmem>>, %arg6: memref<128x128xf32, #tpu.memory_space<vmem>>, %arg7: memref<128x128xf32, #tpu.memory_space<vmem>>) attributes {dimension_semantics = [#tpu.dimension_semantics<parallel>, #tpu.dimension_semantics<arbitrary>], iteration_bounds = array<i64: 1, 1>, scalar_prefetch = 0 : i64, scratch_operands = 1 : i64, tpu.core_type = #tpu.core_type<tc>, window_params = [{transform_indices = @transform_0, window_bounds = array<i64: 128, 128>}, {pipeline_mode = #tpu.pipeline_mode<synchronous>, transform_indices = @transform_1, window_bounds = array<i64: 128, 128>}, {transform_indices = @transform_2, window_bounds = array<i64: 128, 128>}, {transform_indices = @transform_3, window_bounds = array<i64: 128, 128>}, {transform_indices = @transform_4, window_bounds = array<i64: 128, 128>}]} {
    %c0_i32 = arith.constant 0 : i32
    %0 = arith.cmpi eq, %arg1, %c0_i32 : i32
    %1 = arith.extui %0 : i1 to i32
    %c0_i32_0 = arith.constant 0 : i32
    %2 = arith.cmpi ne, %1, %c0_i32_0 : i32
    scf.if %2 {
      %cst_9 = arith.constant 0.000000e+00 : f32
      %15 = vector.broadcast %cst_9 : f32 to vector<128x128xf32>
      %c0_10 = arith.constant 0 : index
      %c0_11 = arith.constant 0 : index
      %16 = vector.load %arg7[%c0_10, %c0_11] : memref<128x128xf32, #tpu.memory_space<vmem>>, vector<128x128xf32>
      tpu.vector_store %arg7[%c0_10, %c0_11], %15 {strides = array<i32>} : memref<128x128xf32, #tpu.memory_space<vmem>>, vector<128x128xf32>,
    } else {
    }
    %c128_i32 = arith.constant 128 : i32
    %3 = arith.muli %arg1, %c128_i32 : i32
    %4 = tpu.assume_multiple %3, 128 : i32
    %5 = arith.index_cast %4 : i32 to index
    %c0 = arith.constant 0 : index
    %6 = vector.load %arg3[%5, %c0] : memref<128x128xbf16, #tpu.memory_space<vmem>>, vector<128x128xbf16>
    %c0_1 = arith.constant 0 : index
    %c0_2 = arith.constant 0 : index
    %7 = vector.load %arg7[%c0_1, %c0_2] : memref<128x128xf32, #tpu.memory_space<vmem>>, vector<128x128xf32>
    %c0_3 = arith.constant 0 : index
    %c0_4 = arith.constant 0 : index
    %8 = vector.load %arg2[%c0_3, %c0_4] : memref<128x128xbf16, #tpu.memory_space<vmem>>, vector<128x128xbf16>
    %cst = arith.constant dense<0.000000e+00> : vector<128x128xf32>
    %9 = tpu.matmul %8, %6, %cst {dimension_numbers = #tpu.dot_dimension_numbers<[1], [0], [0], [1], [0, 0, 1, 1], [], []>} : vector<128x128xbf16>, vector<128x128xbf16>, vector<128x128xf32> -> vector<128x128xf32>
    %10 = arith.addf %7, %9 : vector<128x128xf32>
    %c0_5 = arith.constant 0 : index
    %c0_6 = arith.constant 0 : index
    %11 = vector.load %arg7[%c0_5, %c0_6] : memref<128x128xf32, #tpu.memory_space<vmem>>, vector<128x128xf32>
    tpu.vector_store %arg7[%c0_5, %c0_6], %10 {strides = array<i32>} : memref<128x128xf32, #tpu.memory_space<vmem>>, vector<128x128xf32>,
    %c0_i32_7 = arith.constant 0 : i32
    %12 = arith.cmpi eq, %arg1, %c0_i32_7 : i32
    %13 = arith.extui %12 : i1 to i32
    %c0_i32_8 = arith.constant 0 : i32
    %14 = arith.cmpi ne, %13, %c0_i32_8 : i32
    scf.if %14 {
      %c0_9 = arith.constant 0 : index
      %c0_10 = arith.constant 0 : index
      %15 = vector.load %arg7[%c0_9, %c0_10] : memref<128x128xf32, #tpu.memory_space<vmem>>, vector<128x128xf32>
      %16 = arith.truncf %15 : vector<128x128xf32> to vector<128x128xbf16>
      %c0_11 = arith.constant 0 : index
      %c0_12 = arith.constant 0 : index
      %17 = vector.load %arg5[%c0_11, %c0_12] : memref<128x128xbf16, #tpu.memory_space<vmem>>, vector<128x128xbf16>
      tpu.vector_store %arg5[%c0_11, %c0_12], %16 {strides = array<i32>} : memref<128x128xbf16, #tpu.memory_space<vmem>>, vector<128x128xbf16>,
      %c0_13 = arith.constant 0 : index
      %c0_14 = arith.constant 0 : index
      %18 = vector.load %arg4[%c0_13, %c0_14] : memref<128x128xf32, #tpu.memory_space<vmem>>, vector<128x128xf32>
      %19 = arith.addf %18, %15 : vector<128x128xf32>
      %cst_15 = arith.constant 2.500000e-01 : f32
      %20 = vector.broadcast %cst_15 : f32 to vector<128x128xf32>
      %21 = arith.mulf %19, %20 : vector<128x128xf32>
      %c0_16 = arith.constant 0 : index
      %c0_17 = arith.constant 0 : index
      %22 = vector.load %arg6[%c0_16, %c0_17] : memref<128x128xf32, #tpu.memory_space<vmem>>, vector<128x128xf32>
      tpu.vector_store %arg6[%c0_16, %c0_17], %21 {strides = array<i32>} : memref<128x128xf32, #tpu.memory_space<vmem>>, vector<128x128xf32>,
    } else {
    }
    return
  }
  func.func @transform_0(%arg0: i32, %arg1: i32) -> (i32, i32) {
    %c0_i32 = arith.constant 0 : i32
    return %arg0, %arg1 : i32, i32
  }
  func.func @transform_1(%arg0: i32, %arg1: i32) -> (i32, i32) {
    %c0_i32 = arith.constant 0 : i32
    %c0_i32_0 = arith.constant 0 : i32
    %c0_i32_1 = arith.constant 0 : i32
    return %c0_i32, %c0_i32_0 : i32, i32
  }
  func.func @transform_2(%arg0: i32, %arg1: i32) -> (i32, i32) {
    %c0_i32 = arith.constant 0 : i32
    %c0_i32_0 = arith.constant 0 : i32
    return %arg0, %c0_i32 : i32, i32
  }
  func.func @transform_3(%arg0: i32, %arg1: i32) -> (i32, i32) {
    %c0_i32 = arith.constant 0 : i32
    %c0_i32_0 = arith.constant 0 : i32
    return %arg0, %c0_i32 : i32, i32
  }
  func.func @transform_4(%arg0: i32, %arg1: i32) -> (i32, i32) {
    %c0_i32 = arith.constant 0 : i32
    %c0_i32_0 = arith.constant 0 : i32
    return %arg0, %c0_i32 : i32, i32
  }
}

</mosaic_0001>

<llo_original>
// kernel: _propagate_bipartite.7
$region0: #{_propagate_bipartite.7}
  #allocation0 [shape = 'u32[]', space=smem, size = 0x4, offset = 0x4, fixed_abs, tag = 'smem constant byte address 0x4 - core index']
  #allocation1 [shape = 'u32[144,128]{1,0:T(1,128)}', space=vmem, size = 0x12000, scoped, tag = 'internal scratch']
  #allocation2 [shape = 'f32[128,128]{1,0:T(8,128)}', space=vmem, size = 0x10000, scoped, tag = 'scratch operand']
  %s0 = inlined_call_operand.vmem [shape: bf16[128,128], index: 0, kind: input, shape index: {}]
  %s1 = inlined_call_operand.vmem [shape: bf16[128,128], index: 1, kind: input, shape index: {}]
  %s2 = inlined_call_operand.vmem [shape: f32[128,128], index: 2, kind: input, shape index: {}, may-alias: {2,4}]
  %s3 = inlined_call_operand.vmem [shape: bf16[128,128], index: 3, kind: output, shape index: {0}]
  %s4 = inlined_call_operand.vmem [shape: f32[128,128], index: 4, kind: output, shape index: {1}, may-alias: {2,4}]
  %5 = xla_tuple %s3, %s4
  %s6 = sld [smem:[#allocation0]]
  $region38: #{_propagate_bipartite.7} parent=0
    _
  %s8 = ssub.s32 1, %s6
  %s9 = scalar_select 0, %s8, %s6
  // Predicated region
  $region2: #{_propagate_bipartite.7} parent=0 // pred_check
    _
  $region3: #{_propagate_bipartite.7} parent=0 // pred_check_branch
    %11 = sbr.rel (0) target = $region5
  $region4: #{_propagate_bipartite.7} parent=0 // pred_region
    _
  $region5: #{_propagate_bipartite.7} parent=0 // pred_fallthru
    _
  // Predicated region
  $region6: #{_propagate_bipartite.7} parent=0 // pred_check
    _
  $region7: #{_propagate_bipartite.7} parent=0 // pred_check_branch
    %13 = sbr.rel (0) target = $region9
  $region8: #{_propagate_bipartite.7} parent=0 // pred_region
    _
  $region9: #{_propagate_bipartite.7} parent=0 // pred_fallthru
    _
  // Predicated region
  $region10: #{_propagate_bipartite.7} parent=0 // pred_check
    _
  $region11: #{_propagate_bipartite.7} parent=0 // pred_check_branch
    %15 = sbr.rel (0) target = $region13
  $region12: #{_propagate_bipartite.7} parent=0 // pred_region
    _
  $region13: #{_propagate_bipartite.7} parent=0 // pred_fallthru
    _
  %p17 = scmp.eq.s32.totalorder 0, 0
  // Predicated region
  $region14: #{_propagate_bipartite.7} parent=0 // pred_check
    %p18 = pneg %p17
  $region15: #{_propagate_bipartite.7} parent=0 // pred_check_branch
    %20 = sbr.rel (%p18) target = $region17
  $region16: #{_propagate_bipartite.7} parent=0 // pred_region
    %21 = vst [vmem:[#allocation2] sm:$0xff] 0.0
    %22 = vst [vmem:[#allocation2 + $0x8] sm:$0xff] 0.0
    %23 = vst [vmem:[#allocation2 + $0x10] sm:$0xff] 0.0
    %24 = vst [vmem:[#allocation2 + $0x18] sm:$0xff] 0.0
    %25 = vst [vmem:[#allocation2 + $0x20] sm:$0xff] 0.0
    %26 = vst [vmem:[#allocation2 + $0x28] sm:$0xff] 0.0
    %27 = vst [vmem:[#allocation2 + $0x30] sm:$0xff] 0.0
    %28 = vst [vmem:[#allocation2 + $0x38] sm:$0xff] 0.0
    %29 = vst [vmem:[#allocation2 + $0x40] sm:$0xff] 0.0
    %30 = vst [vmem:[#allocation2 + $0x48] sm:$0xff] 0.0
    %31 = vst [vmem:[#allocation2 + $0x50] sm:$0xff] 0.0
    %32 = vst [vmem:[#allocation2 + $0x58] sm:$0xff] 0.0
    %33 = vst [vmem:[#allocation2 + $0x60] sm:$0xff] 0.0
    %34 = vst [vmem:[#allocation2 + $0x68] sm:$0xff] 0.0
    %35 = vst [vmem:[#allocation2 + $0x70] sm:$0xff] 0.0
    %36 = vst [vmem:[#allocation2 + $0x78] sm:$0xff] 0.0
  $region17: #{_propagate_bipartite.7} parent=0 // pred_fallthru
    _
  %s37 = smul.u32 0, 128
  %s38 = sshra.s32 %s37, 3
  %s39 = sand.u32 %s37, 7
  %s40 = smul.addr %s38, 4
  %s41 = scalar_lea.vmem %s1, %s40
  %v42 = vld [vmem:[%s41] sm:$0xf]
  %v43 = vld [vmem:[%s41 + $0x4] sm:$0xf]
  %v44 = vld [vmem:[%s41 + $0x8] sm:$0xf]
  %v45 = vld [vmem:[%s41 + $0xc] sm:$0xf]
  %v46 = vld [vmem:[%s41 + $0x10] sm:$0xf]
  %v47 = vld [vmem:[%s41 + $0x14] sm:$0xf]
  %v48 = vld [vmem:[%s41 + $0x18] sm:$0xf]
  %v49 = vld [vmem:[%s41 + $0x1c] sm:$0xf]
  %v50 = vld [vmem:[%s41 + $0x20] sm:$0xf]
  %v51 = vld [vmem:[%s41 + $0x24] sm:$0xf]
  %v52 = vld [vmem:[%s41 + $0x28] sm:$0xf]
  %v53 = vld [vmem:[%s41 + $0x2c] sm:$0xf]
  %v54 = vld [vmem:[%s41 + $0x30] sm:$0xf]
  %v55 = vld [vmem:[%s41 + $0x34] sm:$0xf]
  %v56 = vld [vmem:[%s41 + $0x38] sm:$0xf]
  %v57 = vld [vmem:[%s41 + $0x3c] sm:$0xf]
  %v58 = vld [vmem:[#allocation2] sm:$0xff]
  %v59 = vld [vmem:[#allocation2 + $0x8] sm:$0xff]
  %v60 = vld [vmem:[#allocation2 + $0x10] sm:$0xff]
  %v61 = vld [vmem:[#allocation2 + $0x18] sm:$0xff]
  %v62 = vld [vmem:[#allocation2 + $0x20] sm:$0xff]
  %v63 = vld [vmem:[#allocation2 + $0x28] sm:$0xff]
  %v64 = vld [vmem:[#allocation2 + $0x30] sm:$0xff]
  %v65 = vld [vmem:[#allocation2 + $0x38] sm:$0xff]
  %v66 = vld [vmem:[#allocation2 + $0x40] sm:$0xff]
  %v67 = vld [vmem:[#allocation2 + $0x48] sm:$0xff]
  %v68 = vld [vmem:[#allocation2 + $0x50] sm:$0xff]
  %v69 = vld [vmem:[#allocation2 + $0x58] sm:$0xff]
  %v70 = vld [vmem:[#allocation2 + $0x60] sm:$0xff]
  %v71 = vld [vmem:[#allocation2 + $0x68] sm:$0xff]
  %v72 = vld [vmem:[#allocation2 + $0x70] sm:$0xff]
  %v73 = vld [vmem:[#allocation2 + $0x78] sm:$0xff]
  %v74 = vld [vmem:[%s0] sm:$0xf]
  %v75 = vld [vmem:[%s0 + $0x4] sm:$0xf]
  %v76 = vld [vmem:[%s0 + $0x8] sm:$0xf]
  %v77 = vld [vmem:[%s0 + $0xc] sm:$0xf]
  %v78 = vld [vmem:[%s0 + $0x10] sm:$0xf]
  %v79 = vld [vmem:[%s0 + $0x14] sm:$0xf]
  %v80 = vld [vmem:[%s0 + $0x18] sm:$0xf]
  %v81 = vld [vmem:[%s0 + $0x1c] sm:$0xf]
  %v82 = vld [vmem:[%s0 + $0x20] sm:$0xf]
  %v83 = vld [vmem:[%s0 + $0x24] sm:$0xf]
  %v84 = vld [vmem:[%s0 + $0x28] sm:$0xf]
  %v85 = vld [vmem:[%s0 + $0x2c] sm:$0xf]
  %v86 = vld [vmem:[%s0 + $0x30] sm:$0xf]
  %v87 = vld [vmem:[%s0 + $0x34] sm:$0xf]
  %v88 = vld [vmem:[%s0 + $0x38] sm:$0xf]
  %v89 = vld [vmem:[%s0 + $0x3c] sm:$0xf]
  %v106 = vunpack.c.l.b16 %v74
  %v107 = vunpack.c.l.b16 %v75
  %v108 = vunpack.c.l.b16 %v76
  %v109 = vunpack.c.l.b16 %v77
  %v110 = vunpack.c.l.b16 %v78
  %v111 = vunpack.c.l.b16 %v79
  %v112 = vunpack.c.l.b16 %v80
  %v113 = vunpack.c.l.b16 %v81
  %v114 = vunpack.c.l.b16 %v82
  %v115 = vunpack.c.l.b16 %v83
  %v116 = vunpack.c.l.b16 %v84
  %v117 = vunpack.c.l.b16 %v85
  %v118 = vunpack.c.l.b16 %v86
  %v119 = vunpack.c.l.b16 %v87
  %v120 = vunpack.c.l.b16 %v88
  %v121 = vunpack.c.l.b16 %v89
  %v122 = vpack.c.b16 %v107, %v106
  %v123 = vpack.c.b16 %v109, %v108
  %v124 = vpack.c.b16 %v111, %v110
  %v125 = vpack.c.b16 %v113, %v112
  %v126 = vpack.c.b16 %v115, %v114
  %v127 = vpack.c.b16 %v117, %v116
  %v128 = vpack.c.b16 %v119, %v118
  %v129 = vpack.c.b16 %v121, %v120
  %v154 = vunpack.c.l.b16 %v42
  %v155 = vunpack.c.l.b16 %v43
  %v156 = vunpack.c.l.b16 %v44
  %v157 = vunpack.c.l.b16 %v45
  %v158 = vunpack.c.l.b16 %v46
  %v159 = vunpack.c.l.b16 %v47
  %v160 = vunpack.c.l.b16 %v48
  %v161 = vunpack.c.l.b16 %v49
  %v162 = vunpack.c.l.b16 %v50
  %v163 = vunpack.c.l.b16 %v51
  %v164 = vunpack.c.l.b16 %v52
  %v165 = vunpack.c.l.b16 %v53
  %v166 = vunpack.c.l.b16 %v54
  %v167 = vunpack.c.l.b16 %v55
  %v168 = vunpack.c.l.b16 %v56
  %v169 = vunpack.c.l.b16 %v57
  %v170 = vpack.c.b16 %v155, %v154
  %v171 = vpack.c.b16 %v157, %v156
  %v172 = vpack.c.b16 %v159, %v158
  %v173 = vpack.c.b16 %v161, %v160
  %v174 = vpack.c.b16 %v163, %v162
  %v175 = vpack.c.b16 %v165, %v164
  %v176 = vpack.c.b16 %v167, %v166
  %v177 = vpack.c.b16 %v169, %v168
  %186 = vmatprep.subr.bf16.mxu0 0
  %187 = vmatpush1.bf16.msra.mxu0 %v170
  %188 = vmatprep.subr.bf16.mxu0 0
  %189 = vmatpush1.bf16.msra.mxu0 %v171
  %190 = vmatprep.subr.bf16.mxu0 0
  %191 = vmatpush1.bf16.msra.mxu0 %v172
  %192 = vmatprep.subr.bf16.mxu0 0
  %193 = vmatpush1.bf16.msra.mxu0 %v173
  %194 = vmatprep.subr.bf16.mxu0 0
  %195 = vmatpush1.bf16.msra.mxu0 %v174
  %196 = vmatprep.subr.bf16.mxu0 0
  %197 = vmatpush1.bf16.msra.mxu0 %v175
  %198 = vmatprep.subr.bf16.mxu0 0
  %199 = vmatpush1.bf16.msra.mxu0 %v176
  %200 = vmatprep.subr.bf16.mxu0 0
  %201 = vmatpush1.bf16.msra.mxu0 %v177
  %202 = vmatprep.subr.bf16.mxu0 0
  %203 = vmatpush1.bf16.msra.mxu0 0
  %204 = vmatprep.subr.bf16.mxu0 0
  %205 = vmatpush1.bf16.msra.mxu0 0
  %206 = vmatprep.subr.bf16.mxu0 0
  %207 = vmatpush1.bf16.msra.mxu0 0
  %208 = vmatprep.subr.bf16.mxu0 0
  %209 = vmatpush1.bf16.msra.mxu0 0
  %210 = vmatprep.subr.bf16.mxu0 0
  %211 = vmatpush1.bf16.msra.mxu0 0
  %212 = vmatprep.subr.bf16.mxu0 0
  %213 = vmatpush1.bf16.msra.mxu0 0
  %214 = vmatprep.subr.bf16.mxu0 0
  %215 = vmatpush1.bf16.msra.mxu0 0
  %216 = vmatprep.subr.bf16.mxu0 0
  %217 = vmatpush1.bf16.msra.mxu0 0
  %218 = vmatprep.mubr.bf16.mxu0 0
  %219 = vmatmul.mubr.bf16.gmra.mrb[0].mxu0 %v122
  %v220 = vpop.f32.mrb[0].mxu0
  %v221 = vadd.f32 0.0, %v220
  %v222 = vpop.f32.mrb[0].mxu0
  %v223 = vpop.f32.mrb[0].mxu0
  %v224 = vadd.f32 0.0, %v223
  %v225 = vpop.f32.mrb[0].mxu0
  %226 = vmatprep.mubr.bf16.mxu0 0
  %227 = vmatmul.mubr.bf16.gmra.mrb[0].mxu0 %v123
  %v228 = vpop.f32.mrb[0].mxu0
  %v229 = vadd.f32 0.0, %v228
  %v230 = vpop.f32.mrb[0].mxu0
  %v231 = vpop.f32.mrb[0].mxu0
  %v232 = vadd.f32 0.0, %v231
  %v233 = vpop.f32.mrb[0].mxu0
  %234 = vmatprep.mubr.bf16.mxu0 0
  %235 = vmatmul.mubr.bf16.gmra.mrb[0].mxu0 %v124
  %v236 = vpop.f32.mrb[0].mxu0
  %v237 = vadd.f32 0.0, %v236
  %v238 = vpop.f32.mrb[0].mxu0
  %v239 = vpop.f32.mrb[0].mxu0
  %v240 = vadd.f32 0.0, %v239
  %v241 = vpop.f32.mrb[0].mxu0
  %242 = vmatprep.mubr.bf16.mxu0 0
  %243 = vmatmul.mubr.bf16.gmra.mrb[0].mxu0 %v125
  %v244 = vpop.f32.mrb[0].mxu0
  %v245 = vadd.f32 0.0, %v244
  %v246 = vpop.f32.mrb[0].mxu0
  %v247 = vpop.f32.mrb[0].mxu0
  %v248 = vadd.f32 0.0, %v247
  %v249 = vpop.f32.mrb[0].mxu0
  %250 = vmatprep.mubr.bf16.mxu0 0
  %251 = vmatmul.mubr.bf16.gmra.mrb[0].mxu0 %v126
  %v252 = vpop.f32.mrb[0].mxu0
  %v253 = vadd.f32 0.0, %v252
  %v254 = vpop.f32.mrb[0].mxu0
  %v255 = vpop.f32.mrb[0].mxu0
  %v256 = vadd.f32 0.0, %v255
  %v257 = vpop.f32.mrb[0].mxu0
  %258 = vmatprep.mubr.bf16.mxu0 0
  %259 = vmatmul.mubr.bf16.gmra.mrb[0].mxu0 %v127
  %v260 = vpop.f32.mrb[0].mxu0
  %v261 = vadd.f32 0.0, %v260
  %v262 = vpop.f32.mrb[0].mxu0
  %v263 = vpop.f32.mrb[0].mxu0
  %v264 = vadd.f32 0.0, %v263
  %v265 = vpop.f32.mrb[0].mxu0
  %266 = vmatprep.mubr.bf16.mxu0 0
  %267 = vmatmul.mubr.bf16.gmra.mrb[0].mxu0 %v128
  %v268 = vpop.f32.mrb[0].mxu0
  %v269 = vadd.f32 0.0, %v268
  %v270 = vpop.f32.mrb[0].mxu0
  %v271 = vpop.f32.mrb[0].mxu0
  %v272 = vadd.f32 0.0, %v271
  %v273 = vpop.f32.mrb[0].mxu0
  %274 = vmatprep.mubr.bf16.mxu0 0
  %275 = vmatmul.mubr.bf16.gmra.mrb[0].mxu0 %v129
  %v276 = vpop.f32.mrb[0].mxu0
  %v277 = vadd.f32 0.0, %v276
  %v278 = vpop.f32.mrb[0].mxu0
  %v279 = vpop.f32.mrb[0].mxu0
  %v280 = vadd.f32 0.0, %v279
  %v281 = vpop.f32.mrb[0].mxu0
  %282 = vdwg.mxu0
  %v283 = vadd.f32 %v58, %v221
  %v284 = vadd.f32 %v59, %v224
  %v285 = vadd.f32 %v60, %v229
  %v286 = vadd.f32 %v61, %v232
  %v287 = vadd.f32 %v62, %v237
  %v288 = vadd.f32 %v63, %v240
  %v289 = vadd.f32 %v64, %v245
  %v290 = vadd.f32 %v65, %v248
  %v291 = vadd.f32 %v66, %v253
  %v292 = vadd.f32 %v67, %v256
  %v293 = vadd.f32 %v68, %v261
  %v294 = vadd.f32 %v69, %v264
  %v295 = vadd.f32 %v70, %v269
  %v296 = vadd.f32 %v71, %v272
  %v297 = vadd.f32 %v72, %v277
  %v298 = vadd.f32 %v73, %v280
  %299 = vst [vmem:[#allocation2] sm:$0xff] %v283
  %300 = vst [vmem:[#allocation2 + $0x8] sm:$0xff] %v284
  %301 = vst [vmem:[#allocation2 + $0x10] sm:$0xff] %v285
  %302 = vst [vmem:[#allocation2 + $0x18] sm:$0xff] %v286
  %303 = vst [vmem:[#allocation2 + $0x20] sm:$0xff] %v287
  %304 = vst [vmem:[#allocation2 + $0x28] sm:$0xff] %v288
  %305 = vst [vmem:[#allocation2 + $0x30] sm:$0xff] %v289
  %306 = vst [vmem:[#allocation2 + $0x38] sm:$0xff] %v290
  %307 = vst [vmem:[#allocation2 + $0x40] sm:$0xff] %v291
  %308 = vst [vmem:[#allocation2 + $0x48] sm:$0xff] %v292
  %309 = vst [vmem:[#allocation2 + $0x50] sm:$0xff] %v293
  %310 = vst [vmem:[#allocation2 + $0x58] sm:$0xff] %v294
  %311 = vst [vmem:[#allocation2 + $0x60] sm:$0xff] %v295
  %312 = vst [vmem:[#allocation2 + $0x68] sm:$0xff] %v296
  %313 = vst [vmem:[#allocation2 + $0x70] sm:$0xff] %v297
  %314 = vst [vmem:[#allocation2 + $0x78] sm:$0xff] %v298
  // Predicated region
  $region18: #{_propagate_bipartite.7} parent=0 // pred_check
    %p315 = pneg %p17
  $region19: #{_propagate_bipartite.7} parent=0 // pred_check_branch
    %317 = sbr.rel (%p315) target = $region21
  $region20: #{_propagate_bipartite.7} parent=0 // pred_region
    %v318 = vld [vmem:[#allocation2] sm:$0xff]
    %v319 = vld [vmem:[#allocation2 + $0x8] sm:$0xff]
    %v320 = vld [vmem:[#allocation2 + $0x10] sm:$0xff]
    %v321 = vld [vmem:[#allocation2 + $0x18] sm:$0xff]
    %v322 = vld [vmem:[#allocation2 + $0x20] sm:$0xff]
    %v323 = vld [vmem:[#allocation2 + $0x28] sm:$0xff]
    %v324 = vld [vmem:[#allocation2 + $0x30] sm:$0xff]
    %v325 = vld [vmem:[#allocation2 + $0x38] sm:$0xff]
    %v326 = vld [vmem:[#allocation2 + $0x40] sm:$0xff]
    %v327 = vld [vmem:[#allocation2 + $0x48] sm:$0xff]
    %v328 = vld [vmem:[#allocation2 + $0x50] sm:$0xff]
    %v329 = vld [vmem:[#allocation2 + $0x58] sm:$0xff]
    %v330 = vld [vmem:[#allocation2 + $0x60] sm:$0xff]
    %v331 = vld [vmem:[#allocation2 + $0x68] sm:$0xff]
    %v332 = vld [vmem:[#allocation2 + $0x70] sm:$0xff]
    %v333 = vld [vmem:[#allocation2 + $0x78] sm:$0xff]
    %v334 = vpack.c.bf16 %v319, %v318
    %v335 = vpack.c.bf16 %v321, %v320
    %v336 = vpack.c.bf16 %v323, %v322
    %v337 = vpack.c.bf16 %v325, %v324
    %v338 = vpack.c.bf16 %v327, %v326
    %v339 = vpack.c.bf16 %v329, %v328
    %v340 = vpack.c.bf16 %v331, %v330
    %v341 = vpack.c.bf16 %v333, %v332
    %v350 = vunpack.c.l.b16 %v334
    %v351 = vunpack.c.h.b16 %v334
    %v352 = vunpack.c.l.b16 %v335
    %v353 = vunpack.c.h.b16 %v335
    %v354 = vunpack.c.l.b16 %v336
    %v355 = vunpack.c.h.b16 %v336
    %v356 = vunpack.c.l.b16 %v337
    %v357 = vunpack.c.h.b16 %v337
    %v358 = vunpack.c.l.b16 %v338
    %v359 = vunpack.c.h.b16 %v338
    %v360 = vunpack.c.l.b16 %v339
    %v361 = vunpack.c.h.b16 %v339
    %v362 = vunpack.c.l.b16 %v340
    %v363 = vunpack.c.h.b16 %v340
    %v364 = vunpack.c.l.b16 %v341
    %v365 = vunpack.c.h.b16 %v341
    %v366 = vpack.c.b16 %v350, %v350
    %v367 = vpack.c.b16 %v351, %v351
    %v368 = vpack.c.b16 %v352, %v352
    %v369 = vpack.c.b16 %v353, %v353
    %v370 = vpack.c.b16 %v354, %v354
    %v371 = vpack.c.b16 %v355, %v355
    %v372 = vpack.c.b16 %v356, %v356
    %v373 = vpack.c.b16 %v357, %v357
    %v374 = vpack.c.b16 %v358, %v358
    %v375 = vpack.c.b16 %v359, %v359
    %v376 = vpack.c.b16 %v360, %v360
    %v377 = vpack.c.b16 %v361, %v361
    %v378 = vpack.c.b16 %v362, %v362
    %v379 = vpack.c.b16 %v363, %v363
    %v380 = vpack.c.b16 %v364, %v364
    %v381 = vpack.c.b16 %v365, %v365
    %398 = vst [vmem:[%s3] sm:$0xf] %v366
    %399 = vst [vmem:[%s3 + $0x4] sm:$0xf] %v367
    %400 = vst [vmem:[%s3 + $0x8] sm:$0xf] %v368
    %401 = vst [vmem:[%s3 + $0xc] sm:$0xf] %v369
    %402 = vst [vmem:[%s3 + $0x10] sm:$0xf] %v370
    %403 = vst [vmem:[%s3 + $0x14] sm:$0xf] %v371
    %404 = vst [vmem:[%s3 + $0x18] sm:$0xf] %v372
    %405 = vst [vmem:[%s3 + $0x1c] sm:$0xf] %v373
    %406 = vst [vmem:[%s3 + $0x20] sm:$0xf] %v374
    %407 = vst [vmem:[%s3 + $0x24] sm:$0xf] %v375
    %408 = vst [vmem:[%s3 + $0x28] sm:$0xf] %v376
    %409 = vst [vmem:[%s3 + $0x2c] sm:$0xf] %v377
    %410 = vst [vmem:[%s3 + $0x30] sm:$0xf] %v378
    %411 = vst [vmem:[%s3 + $0x34] sm:$0xf] %v379
    %412 = vst [vmem:[%s3 + $0x38] sm:$0xf] %v380
    %413 = vst [vmem:[%s3 + $0x3c] sm:$0xf] %v381
    %v414 = vld [vmem:[%s2] sm:$0xff]
    %v415 = vld [vmem:[%s2 + $0x8] sm:$0xff]
    %v416 = vld [vmem:[%s2 + $0x10] sm:$0xff]
    %v417 = vld [vmem:[%s2 + $0x18] sm:$0xff]
    %v418 = vld [vmem:[%s2 + $0x20] sm:$0xff]
    %v419 = vld [vmem:[%s2 + $0x28] sm:$0xff]
    %v420 = vld [vmem:[%s2 + $0x30] sm:$0xff]
    %v421 = vld [vmem:[%s2 + $0x38] sm:$0xff]
    %v422 = vld [vmem:[%s2 + $0x40] sm:$0xff]
    %v423 = vld [vmem:[%s2 + $0x48] sm:$0xff]
    %v424 = vld [vmem:[%s2 + $0x50] sm:$0xff]
    %v425 = vld [vmem:[%s2 + $0x58] sm:$0xff]
    %v426 = vld [vmem:[%s2 + $0x60] sm:$0xff]
    %v427 = vld [vmem:[%s2 + $0x68] sm:$0xff]
    %v428 = vld [vmem:[%s2 + $0x70] sm:$0xff]
    %v429 = vld [vmem:[%s2 + $0x78] sm:$0xff]
    %v430 = vadd.f32 %v414, %v318
    %v431 = vadd.f32 %v415, %v319
    %v432 = vadd.f32 %v416, %v320
    %v433 = vadd.f32 %v417, %v321
    %v434 = vadd.f32 %v418, %v322
    %v435 = vadd.f32 %v419, %v323
    %v436 = vadd.f32 %v420, %v324
    %v437 = vadd.f32 %v421, %v325
    %v438 = vadd.f32 %v422, %v326
    %v439 = vadd.f32 %v423, %v327
    %v440 = vadd.f32 %v424, %v328
    %v441 = vadd.f32 %v425, %v329
    %v442 = vadd.f32 %v426, %v330
    %v443 = vadd.f32 %v427, %v331
    %v444 = vadd.f32 %v428, %v332
    %v445 = vadd.f32 %v429, %v333
    %446 = vst [vmem:[%s4] sm:$0xff] %v430
    %447 = vst [vmem:[%s4 + $0x8] sm:$0xff] %v431
    %448 = vst [vmem:[%s4 + $0x10] sm:$0xff] %v432
    %449 = vst [vmem:[%s4 + $0x18] sm:$0xff] %v433
    %450 = vst [vmem:[%s4 + $0x20] sm:$0xff] %v434
    %451 = vst [vmem:[%s4 + $0x28] sm:$0xff] %v435
    %452 = vst [vmem:[%s4 + $0x30] sm:$0xff] %v436
    %453 = vst [vmem:[%s4 + $0x38] sm:$0xff] %v437
    %454 = vst [vmem:[%s4 + $0x40] sm:$0xff] %v438
    %455 = vst [vmem:[%s4 + $0x48] sm:$0xff] %v439
    %456 = vst [vmem:[%s4 + $0x50] sm:$0xff] %v440
    %457 = vst [vmem:[%s4 + $0x58] sm:$0xff] %v441
    %458 = vst [vmem:[%s4 + $0x60] sm:$0xff] %v442
    %459 = vst [vmem:[%s4 + $0x68] sm:$0xff] %v443
    %460 = vst [vmem:[%s4 + $0x70] sm:$0xff] %v444
    %461 = vst [vmem:[%s4 + $0x78] sm:$0xff] %v445
  $region21: #{_propagate_bipartite.7} parent=0 // pred_fallthru
    _
  // Predicated region
  $region22: #{_propagate_bipartite.7} parent=0 // pred_check
    _
  $region23: #{_propagate_bipartite.7} parent=0 // pred_check_branch
    %463 = sbr.rel (0) target = $region25
  $region24: #{_propagate_bipartite.7} parent=0 // pred_region
    _
  $region25: #{_propagate_bipartite.7} parent=0 // pred_fallthru
    _
  // Predicated region
  $region26: #{_propagate_bipartite.7} parent=0 // pred_check
    _
  $region27: #{_propagate_bipartite.7} parent=0 // pred_check_branch
    %465 = sbr.rel (0) target = $region29
  $region28: #{_propagate_bipartite.7} parent=0 // pred_region
    _
  $region29: #{_propagate_bipartite.7} parent=0 // pred_fallthru
    _
  // Predicated region
  $region30: #{_propagate_bipartite.7} parent=0 // pred_check
    _
  $region31: #{_propagate_bipartite.7} parent=0 // pred_check_branch
    %467 = sbr.rel (0) target = $region33
  $region32: #{_propagate_bipartite.7} parent=0 // pred_region
    _
  $region33: #{_propagate_bipartite.7} parent=0 // pred_fallthru
    _
  // Predicated region
  $region34: #{_propagate_bipartite.7} parent=0 // pred_check
    _
  $region35: #{_propagate_bipartite.7} parent=0 // pred_check_branch
    %469 = sbr.rel (0) target = $region37
  $region36: #{_propagate_bipartite.7} parent=0 // pred_region
    _
  $region37: #{_propagate_bipartite.7} parent=0 // pred_fallthru
    _

// kernel: _propagate_bipartite.10
$region0: #{_propagate_bipartite.10}
  #allocation0 [shape = 'u32[]', space=smem, size = 0x4, offset = 0x4, fixed_abs, tag = 'smem constant byte address 0x4 - core index']
  #allocation1 [shape = 'u32[144,128]{1,0:T(1,128)}', space=vmem, size = 0x12000, scoped, tag = 'internal scratch']
  #allocation2 [shape = 'f32[128,128]{1,0:T(8,128)}', space=vmem, size = 0x10000, scoped, tag = 'scratch operand']
  %s0 = inlined_call_operand.vmem [shape: bf16[128,128], index: 0, kind: input, shape index: {}]
  %s1 = inlined_call_operand.vmem [shape: bf16[128,128], index: 1, kind: input, shape index: {}]
  %s2 = inlined_call_operand.vmem [shape: f32[128,128], index: 2, kind: input, shape index: {}, may-alias: {2,4}]
  %s3 = inlined_call_operand.hbm [shape: bf16[128,128], index: 3, kind: output, shape index: {0}]
  %s4 = inlined_call_operand.vmem [shape: f32[128,128], index: 4, kind: output, shape index: {1}, may-alias: {2,4}]
  %5 = xla_tuple %s3, %s4
  %s6 = sld [smem:[#allocation0]]
  $region38: #{_propagate_bipartite.10} parent=0
    _
  %s8 = ssub.s32 1, %s6
  %s9 = scalar_select 0, %s8, %s6
  $region1: #{_propagate_bipartite.10} parent=0
    #allocation3 [shape = 'u8[32768]{0}', space=vmem, size = 0x8000, scoped, tag = 'output window, operand 0, single buffered']
    #allocation4 [shape = 's32[1]{0}', space=sflag, size = 0x4, scoped, tag = 'scoped memory for _propagate_bipartite.10']
    %10 = vsyncpa [#allocation4], 0
    // Predicated region
    $region2: #{_propagate_bipartite.10} parent=1 // pred_check
      _
    $region3: #{_propagate_bipartite.10} parent=1 // pred_check_branch
      %12 = sbr.rel (0) target = $region5
    $region4: #{_propagate_bipartite.10} parent=1 // pred_region
      _
    $region5: #{_propagate_bipartite.10} parent=1 // pred_fallthru
      _
    // Predicated region
    $region6: #{_propagate_bipartite.10} parent=1 // pred_check
      _
    $region7: #{_propagate_bipartite.10} parent=1 // pred_check_branch
      %14 = sbr.rel (0) target = $region9
    $region8: #{_propagate_bipartite.10} parent=1 // pred_region
      _
    $region9: #{_propagate_bipartite.10} parent=1 // pred_fallthru
      _
    // Predicated region
    $region10: #{_propagate_bipartite.10} parent=1 // pred_check
      _
    $region11: #{_propagate_bipartite.10} parent=1 // pred_check_branch
      %16 = sbr.rel (0) target = $region13
    $region12: #{_propagate_bipartite.10} parent=1 // pred_region
      _
    $region13: #{_propagate_bipartite.10} parent=1 // pred_fallthru
      _
    %p18 = scmp.eq.s32.totalorder 0, 0
    // Predicated region
    $region14: #{_propagate_bipartite.10} parent=1 // pred_check
      %p19 = pneg %p18
    $region15: #{_propagate_bipartite.10} parent=1 // pred_check_branch
      %21 = sbr.rel (%p19) target = $region17
    $region16: #{_propagate_bipartite.10} parent=1 // pred_region
      %22 = vst [vmem:[#allocation2] sm:$0xff] 0.0
      %23 = vst [vmem:[#allocation2 + $0x8] sm:$0xff] 0.0
      %24 = vst [vmem:[#allocation2 + $0x10] sm:$0xff] 0.0
      %25 = vst [vmem:[#allocation2 + $0x18] sm:$0xff] 0.0
      %26 = vst [vmem:[#allocation2 + $0x20] sm:$0xff] 0.0
      %27 = vst [vmem:[#allocation2 + $0x28] sm:$0xff] 0.0
      %28 = vst [vmem:[#allocation2 + $0x30] sm:$0xff] 0.0
      %29 = vst [vmem:[#allocation2 + $0x38] sm:$0xff] 0.0
      %30 = vst [vmem:[#allocation2 + $0x40] sm:$0xff] 0.0
      %31 = vst [vmem:[#allocation2 + $0x48] sm:$0xff] 0.0
      %32 = vst [vmem:[#allocation2 + $0x50] sm:$0xff] 0.0
      %33 = vst [vmem:[#allocation2 + $0x58] sm:$0xff] 0.0
      %34 = vst [vmem:[#allocation2 + $0x60] sm:$0xff] 0.0
      %35 = vst [vmem:[#allocation2 + $0x68] sm:$0xff] 0.0
      %36 = vst [vmem:[#allocation2 + $0x70] sm:$0xff] 0.0
      %37 = vst [vmem:[#allocation2 + $0x78] sm:$0xff] 0.0
    $region17: #{_propagate_bipartite.10} parent=1 // pred_fallthru
      _
    %s38 = smul.u32 0, 128
    %s39 = sshra.s32 %s38, 3
    %s40 = sand.u32 %s38, 7
    %s41 = smul.addr %s39, 4
    %s42 = scalar_lea.vmem %s1, %s41
    %v43 = vld [vmem:[%s42] sm:$0xf]
    %v44 = vld [vmem:[%s42 + $0x4] sm:$0xf]
    %v45 = vld [vmem:[%s42 + $0x8] sm:$0xf]
    %v46 = vld [vmem:[%s42 + $0xc] sm:$0xf]
    %v47 = vld [vmem:[%s42 + $0x10] sm:$0xf]
    %v48 = vld [vmem:[%s42 + $0x14] sm:$0xf]
    %v49 = vld [vmem:[%s42 + $0x18] sm:$0xf]
    %v50 = vld [vmem:[%s42 + $0x1c] sm:$0xf]
    %v51 = vld [vmem:[%s42 + $0x20] sm:$0xf]
    %v52 = vld [vmem:[%s42 + $0x24] sm:$0xf]
    %v53 = vld [vmem:[%s42 + $0x28] sm:$0xf]
    %v54 = vld [vmem:[%s42 + $0x2c] sm:$0xf]
    %v55 = vld [vmem:[%s42 + $0x30] sm:$0xf]
    %v56 = vld [vmem:[%s42 + $0x34] sm:$0xf]
    %v57 = vld [vmem:[%s42 + $0x38] sm:$0xf]
    %v58 = vld [vmem:[%s42 + $0x3c] sm:$0xf]
    %v59 = vld [vmem:[#allocation2] sm:$0xff]
    %v60 = vld [vmem:[#allocation2 + $0x8] sm:$0xff]
    %v61 = vld [vmem:[#allocation2 + $0x10] sm:$0xff]
    %v62 = vld [vmem:[#allocation2 + $0x18] sm:$0xff]
    %v63 = vld [vmem:[#allocation2 + $0x20] sm:$0xff]
    %v64 = vld [vmem:[#allocation2 + $0x28] sm:$0xff]
    %v65 = vld [vmem:[#allocation2 + $0x30] sm:$0xff]
    %v66 = vld [vmem:[#allocation2 + $0x38] sm:$0xff]
    %v67 = vld [vmem:[#allocation2 + $0x40] sm:$0xff]
    %v68 = vld [vmem:[#allocation2 + $0x48] sm:$0xff]
    %v69 = vld [vmem:[#allocation2 + $0x50] sm:$0xff]
    %v70 = vld [vmem:[#allocation2 + $0x58] sm:$0xff]
    %v71 = vld [vmem:[#allocation2 + $0x60] sm:$0xff]
    %v72 = vld [vmem:[#allocation2 + $0x68] sm:$0xff]
    %v73 = vld [vmem:[#allocation2 + $0x70] sm:$0xff]
    %v74 = vld [vmem:[#allocation2 + $0x78] sm:$0xff]
    %v75 = vld [vmem:[%s0] sm:$0xf]
    %v76 = vld [vmem:[%s0 + $0x4] sm:$0xf]
    %v77 = vld [vmem:[%s0 + $0x8] sm:$0xf]
    %v78 = vld [vmem:[%s0 + $0xc] sm:$0xf]
    %v79 = vld [vmem:[%s0 + $0x10] sm:$0xf]
    %v80 = vld [vmem:[%s0 + $0x14] sm:$0xf]
    %v81 = vld [vmem:[%s0 + $0x18] sm:$0xf]
    %v82 = vld [vmem:[%s0 + $0x1c] sm:$0xf]
    %v83 = vld [vmem:[%s0 + $0x20] sm:$0xf]
    %v84 = vld [vmem:[%s0 + $0x24] sm:$0xf]
    %v85 = vld [vmem:[%s0 + $0x28] sm:$0xf]
    %v86 = vld [vmem:[%s0 + $0x2c] sm:$0xf]
    %v87 = vld [vmem:[%s0 + $0x30] sm:$0xf]
    %v88 = vld [vmem:[%s0 + $0x34] sm:$0xf]
    %v89 = vld [vmem:[%s0 + $0x38] sm:$0xf]
    %v90 = vld [vmem:[%s0 + $0x3c] sm:$0xf]
    %v107 = vunpack.c.l.b16 %v75
    %v108 = vunpack.c.l.b16 %v76
    %v109 = vunpack.c.l.b16 %v77
    %v110 = vunpack.c.l.b16 %v78
    %v111 = vunpack.c.l.b16 %v79
    %v112 = vunpack.c.l.b16 %v80
    %v113 = vunpack.c.l.b16 %v81
    %v114 = vunpack.c.l.b16 %v82
    %v115 = vunpack.c.l.b16 %v83
    %v116 = vunpack.c.l.b16 %v84
    %v117 = vunpack.c.l.b16 %v85
    %v118 = vunpack.c.l.b16 %v86
    %v119 = vunpack.c.l.b16 %v87
    %v120 = vunpack.c.l.b16 %v88
    %v121 = vunpack.c.l.b16 %v89
    %v122 = vunpack.c.l.b16 %v90
    %v123 = vpack.c.b16 %v108, %v107
    %v124 = vpack.c.b16 %v110, %v109
    %v125 = vpack.c.b16 %v112, %v111
    %v126 = vpack.c.b16 %v114, %v113
    %v127 = vpack.c.b16 %v116, %v115
    %v128 = vpack.c.b16 %v118, %v117
    %v129 = vpack.c.b16 %v120, %v119
    %v130 = vpack.c.b16 %v122, %v121
    %v155 = vunpack.c.l.b16 %v43
    %v156 = vunpack.c.l.b16 %v44
    %v157 = vunpack.c.l.b16 %v45
    %v158 = vunpack.c.l.b16 %v46
    %v159 = vunpack.c.l.b16 %v47
    %v160 = vunpack.c.l.b16 %v48
    %v161 = vunpack.c.l.b16 %v49
    %v162 = vunpack.c.l.b16 %v50
    %v163 = vunpack.c.l.b16 %v51
    %v164 = vunpack.c.l.b16 %v52
    %v165 = vunpack.c.l.b16 %v53
    %v166 = vunpack.c.l.b16 %v54
    %v167 = vunpack.c.l.b16 %v55
    %v168 = vunpack.c.l.b16 %v56
    %v169 = vunpack.c.l.b16 %v57
    %v170 = vunpack.c.l.b16 %v58
    %v171 = vpack.c.b16 %v156, %v155
    %v172 = vpack.c.b16 %v158, %v157
    %v173 = vpack.c.b16 %v160, %v159
    %v174 = vpack.c.b16 %v162, %v161
    %v175 = vpack.c.b16 %v164, %v163
    %v176 = vpack.c.b16 %v166, %v165
    %v177 = vpack.c.b16 %v168, %v167
    %v178 = vpack.c.b16 %v170, %v169
    %187 = vmatprep.subr.bf16.mxu0 0
    %188 = vmatpush1.bf16.msra.mxu0 %v171
    %189 = vmatprep.subr.bf16.mxu0 0
    %190 = vmatpush1.bf16.msra.mxu0 %v172
    %191 = vmatprep.subr.bf16.mxu0 0
    %192 = vmatpush1.bf16.msra.mxu0 %v173
    %193 = vmatprep.subr.bf16.mxu0 0
    %194 = vmatpush1.bf16.msra.mxu0 %v174
    %195 = vmatprep.subr.bf16.mxu0 0
    %196 = vmatpush1.bf16.msra.mxu0 %v175
    %197 = vmatprep.subr.bf16.mxu0 0
    %198 = vmatpush1.bf16.msra.mxu0 %v176
    %199 = vmatprep.subr.bf16.mxu0 0
    %200 = vmatpush1.bf16.msra.mxu0 %v177
    %201 = vmatprep.subr.bf16.mxu0 0
    %202 = vmatpush1.bf16.msra.mxu0 %v178
    %203 = vmatprep.subr.bf16.mxu0 0
    %204 = vmatpush1.bf16.msra.mxu0 0
    %205 = vmatprep.subr.bf16.mxu0 0
    %206 = vmatpush1.bf16.msra.mxu0 0
    %207 = vmatprep.subr.bf16.mxu0 0
    %208 = vmatpush1.bf16.msra.mxu0 0
    %209 = vmatprep.subr.bf16.mxu0 0
    %210 = vmatpush1.bf16.msra.mxu0 0
    %211 = vmatprep.subr.bf16.mxu0 0
    %212 = vmatpush1.bf16.msra.mxu0 0
    %213 = vmatprep.subr.bf16.mxu0 0
    %214 = vmatpush1.bf16.msra.mxu0 0
    %215 = vmatprep.subr.bf16.mxu0 0
    %216 = vmatpush1.bf16.msra.mxu0 0
    %217 = vmatprep.subr.bf16.mxu0 0
    %218 = vmatpush1.bf16.msra.mxu0 0
    %219 = vmatprep.mubr.bf16.mxu0 0
    %220 = vmatmul.mubr.bf16.gmra.mrb[0].mxu0 %v123
    %v221 = vpop.f32.mrb[0].mxu0
    %v222 = vadd.f32 0.0, %v221
    %v223 = vpop.f32.mrb[0].mxu0
    %v224 = vpop.f32.mrb[0].mxu0
    %v225 = vadd.f32 0.0, %v224
    %v226 = vpop.f32.mrb[0].mxu0
    %227 = vmatprep.mubr.bf16.mxu0 0
    %228 = vmatmul.mubr.bf16.gmra.mrb[0].mxu0 %v124
    %v229 = vpop.f32.mrb[0].mxu0
    %v230 = vadd.f32 0.0, %v229
    %v231 = vpop.f32.mrb[0].mxu0
    %v232 = vpop.f32.mrb[0].mxu0
    %v233 = vadd.f32 0.0, %v232
    %v234 = vpop.f32.mrb[0].mxu0
    %235 = vmatprep.mubr.bf16.mxu0 0
    %236 = vmatmul.mubr.bf16.gmra.mrb[0].mxu0 %v125
    %v237 = vpop.f32.mrb[0].mxu0
    %v238 = vadd.f32 0.0, %v237
    %v239 = vpop.f32.mrb[0].mxu0
    %v240 = vpop.f32.mrb[0].mxu0
    %v241 = vadd.f32 0.0, %v240
    %v242 = vpop.f32.mrb[0].mxu0
    %243 = vmatprep.mubr.bf16.mxu0 0
    %244 = vmatmul.mubr.bf16.gmra.mrb[0].mxu0 %v126
    %v245 = vpop.f32.mrb[0].mxu0
    %v246 = vadd.f32 0.0, %v245
    %v247 = vpop.f32.mrb[0].mxu0
    %v248 = vpop.f32.mrb[0].mxu0
    %v249 = vadd.f32 0.0, %v248
    %v250 = vpop.f32.mrb[0].mxu0
    %251 = vmatprep.mubr.bf16.mxu0 0
    %252 = vmatmul.mubr.bf16.gmra.mrb[0].mxu0 %v127
    %v253 = vpop.f32.mrb[0].mxu0
    %v254 = vadd.f32 0.0, %v253
    %v255 = vpop.f32.mrb[0].mxu0
    %v256 = vpop.f32.mrb[0].mxu0
    %v257 = vadd.f32 0.0, %v256
    %v258 = vpop.f32.mrb[0].mxu0
    %259 = vmatprep.mubr.bf16.mxu0 0
    %260 = vmatmul.mubr.bf16.gmra.mrb[0].mxu0 %v128
    %v261 = vpop.f32.mrb[0].mxu0
    %v262 = vadd.f32 0.0, %v261
    %v263 = vpop.f32.mrb[0].mxu0
    %v264 = vpop.f32.mrb[0].mxu0
    %v265 = vadd.f32 0.0, %v264
    %v266 = vpop.f32.mrb[0].mxu0
    %267 = vmatprep.mubr.bf16.mxu0 0
    %268 = vmatmul.mubr.bf16.gmra.mrb[0].mxu0 %v129
    %v269 = vpop.f32.mrb[0].mxu0
    %v270 = vadd.f32 0.0, %v269
    %v271 = vpop.f32.mrb[0].mxu0
    %v272 = vpop.f32.mrb[0].mxu0
    %v273 = vadd.f32 0.0, %v272
    %v274 = vpop.f32.mrb[0].mxu0
    %275 = vmatprep.mubr.bf16.mxu0 0
    %276 = vmatmul.mubr.bf16.gmra.mrb[0].mxu0 %v130
    %v277 = vpop.f32.mrb[0].mxu0
    %v278 = vadd.f32 0.0, %v277
    %v279 = vpop.f32.mrb[0].mxu0
    %v280 = vpop.f32.mrb[0].mxu0
    %v281 = vadd.f32 0.0, %v280
    %v282 = vpop.f32.mrb[0].mxu0
    %283 = vdwg.mxu0
    %v284 = vadd.f32 %v59, %v222
    %v285 = vadd.f32 %v60, %v225
    %v286 = vadd.f32 %v61, %v230
    %v287 = vadd.f32 %v62, %v233
    %v288 = vadd.f32 %v63, %v238
    %v289 = vadd.f32 %v64, %v241
    %v290 = vadd.f32 %v65, %v246
    %v291 = vadd.f32 %v66, %v249
    %v292 = vadd.f32 %v67, %v254
    %v293 = vadd.f32 %v68, %v257
    %v294 = vadd.f32 %v69, %v262
    %v295 = vadd.f32 %v70, %v265
    %v296 = vadd.f32 %v71, %v270
    %v297 = vadd.f32 %v72, %v273
    %v298 = vadd.f32 %v73, %v278
    %v299 = vadd.f32 %v74, %v281
    %300 = vst [vmem:[#allocation2] sm:$0xff] %v284
    %301 = vst [vmem:[#allocation2 + $0x8] sm:$0xff] %v285
    %302 = vst [vmem:[#allocation2 + $0x10] sm:$0xff] %v286
    %303 = vst [vmem:[#allocation2 + $0x18] sm:$0xff] %v287
    %304 = vst [vmem:[#allocation2 + $0x20] sm:$0xff] %v288
    %305 = vst [vmem:[#allocation2 + $0x28] sm:$0xff] %v289
    %306 = vst [vmem:[#allocation2 + $0x30] sm:$0xff] %v290
    %307 = vst [vmem:[#allocation2 + $0x38] sm:$0xff] %v291
    %308 = vst [vmem:[#allocation2 + $0x40] sm:$0xff] %v292
    %309 = vst [vmem:[#allocation2 + $0x48] sm:$0xff] %v293
    %310 = vst [vmem:[#allocation2 + $0x50] sm:$0xff] %v294
    %311 = vst [vmem:[#allocation2 + $0x58] sm:$0xff] %v295
    %312 = vst [vmem:[#allocation2 + $0x60] sm:$0xff] %v296
    %313 = vst [vmem:[#allocation2 + $0x68] sm:$0xff] %v297
    %314 = vst [vmem:[#allocation2 + $0x70] sm:$0xff] %v298
    %315 = vst [vmem:[#allocation2 + $0x78] sm:$0xff] %v299
    // Predicated region
    $region18: #{_propagate_bipartite.10} parent=1 // pred_check
      %p316 = pneg %p18
    $region19: #{_propagate_bipartite.10} parent=1 // pred_check_branch
      %318 = sbr.rel (%p316) target = $region21
    $region20: #{_propagate_bipartite.10} parent=1 // pred_region
      %v319 = vld [vmem:[#allocation2] sm:$0xff]
      %v320 = vld [vmem:[#allocation2 + $0x8] sm:$0xff]
      %v321 = vld [vmem:[#allocation2 + $0x10] sm:$0xff]
      %v322 = vld [vmem:[#allocation2 + $0x18] sm:$0xff]
      %v323 = vld [vmem:[#allocation2 + $0x20] sm:$0xff]
      %v324 = vld [vmem:[#allocation2 + $0x28] sm:$0xff]
      %v325 = vld [vmem:[#allocation2 + $0x30] sm:$0xff]
      %v326 = vld [vmem:[#allocation2 + $0x38] sm:$0xff]
      %v327 = vld [vmem:[#allocation2 + $0x40] sm:$0xff]
      %v328 = vld [vmem:[#allocation2 + $0x48] sm:$0xff]
      %v329 = vld [vmem:[#allocation2 + $0x50] sm:$0xff]
      %v330 = vld [vmem:[#allocation2 + $0x58] sm:$0xff]
      %v331 = vld [vmem:[#allocation2 + $0x60] sm:$0xff]
      %v332 = vld [vmem:[#allocation2 + $0x68] sm:$0xff]
      %v333 = vld [vmem:[#allocation2 + $0x70] sm:$0xff]
      %v334 = vld [vmem:[#allocation2 + $0x78] sm:$0xff]
      %v335 = vpack.c.bf16 %v320, %v319
      %v336 = vpack.c.bf16 %v322, %v321
      %v337 = vpack.c.bf16 %v324, %v323
      %v338 = vpack.c.bf16 %v326, %v325
      %v339 = vpack.c.bf16 %v328, %v327
      %v340 = vpack.c.bf16 %v330, %v329
      %v341 = vpack.c.bf16 %v332, %v331
      %v342 = vpack.c.bf16 %v334, %v333
      %v351 = vunpack.c.l.b16 %v335
      %v352 = vunpack.c.h.b16 %v335
      %v353 = vunpack.c.l.b16 %v336
      %v354 = vunpack.c.h.b16 %v336
      %v355 = vunpack.c.l.b16 %v337
      %v356 = vunpack.c.h.b16 %v337
      %v357 = vunpack.c.l.b16 %v338
      %v358 = vunpack.c.h.b16 %v338
      %v359 = vunpack.c.l.b16 %v339
      %v360 = vunpack.c.h.b16 %v339
      %v361 = vunpack.c.l.b16 %v340
      %v362 = vunpack.c.h.b16 %v340
      %v363 = vunpack.c.l.b16 %v341
      %v364 = vunpack.c.h.b16 %v341
      %v365 = vunpack.c.l.b16 %v342
      %v366 = vunpack.c.h.b16 %v342
      %v367 = vpack.c.b16 %v351, %v351
      %v368 = vpack.c.b16 %v352, %v352
      %v369 = vpack.c.b16 %v353, %v353
      %v370 = vpack.c.b16 %v354, %v354
      %v371 = vpack.c.b16 %v355, %v355
      %v372 = vpack.c.b16 %v356, %v356
      %v373 = vpack.c.b16 %v357, %v357
      %v374 = vpack.c.b16 %v358, %v358
      %v375 = vpack.c.b16 %v359, %v359
      %v376 = vpack.c.b16 %v360, %v360
      %v377 = vpack.c.b16 %v361, %v361
      %v378 = vpack.c.b16 %v362, %v362
      %v379 = vpack.c.b16 %v363, %v363
      %v380 = vpack.c.b16 %v364, %v364
      %v381 = vpack.c.b16 %v365, %v365
      %v382 = vpack.c.b16 %v366, %v366
      %399 = vst [vmem:[#allocation3] sm:$0xf] %v367
      %400 = vst [vmem:[#allocation3 + $0x4] sm:$0xf] %v368
      %401 = vst [vmem:[#allocation3 + $0x8] sm:$0xf] %v369
      %402 = vst [vmem:[#allocation3 + $0xc] sm:$0xf] %v370
      %403 = vst [vmem:[#allocation3 + $0x10] sm:$0xf] %v371
      %404 = vst [vmem:[#allocation3 + $0x14] sm:$0xf] %v372
      %405 = vst [vmem:[#allocation3 + $0x18] sm:$0xf] %v373
      %406 = vst [vmem:[#allocation3 + $0x1c] sm:$0xf] %v374
      %407 = vst [vmem:[#allocation3 + $0x20] sm:$0xf] %v375
      %408 = vst [vmem:[#allocation3 + $0x24] sm:$0xf] %v376
      %409 = vst [vmem:[#allocation3 + $0x28] sm:$0xf] %v377
      %410 = vst [vmem:[#allocation3 + $0x2c] sm:$0xf] %v378
      %411 = vst [vmem:[#allocation3 + $0x30] sm:$0xf] %v379
      %412 = vst [vmem:[#allocation3 + $0x34] sm:$0xf] %v380
      %413 = vst [vmem:[#allocation3 + $0x38] sm:$0xf] %v381
      %414 = vst [vmem:[#allocation3 + $0x3c] sm:$0xf] %v382
      %v415 = vld [vmem:[%s2] sm:$0xff]
      %v416 = vld [vmem:[%s2 + $0x8] sm:$0xff]
      %v417 = vld [vmem:[%s2 + $0x10] sm:$0xff]
      %v418 = vld [vmem:[%s2 + $0x18] sm:$0xff]
      %v419 = vld [vmem:[%s2 + $0x20] sm:$0xff]
      %v420 = vld [vmem:[%s2 + $0x28] sm:$0xff]
      %v421 = vld [vmem:[%s2 + $0x30] sm:$0xff]
      %v422 = vld [vmem:[%s2 + $0x38] sm:$0xff]
      %v423 = vld [vmem:[%s2 + $0x40] sm:$0xff]
      %v424 = vld [vmem:[%s2 + $0x48] sm:$0xff]
      %v425 = vld [vmem:[%s2 + $0x50] sm:$0xff]
      %v426 = vld [vmem:[%s2 + $0x58] sm:$0xff]
      %v427 = vld [vmem:[%s2 + $0x60] sm:$0xff]
      %v428 = vld [vmem:[%s2 + $0x68] sm:$0xff]
      %v429 = vld [vmem:[%s2 + $0x70] sm:$0xff]
      %v430 = vld [vmem:[%s2 + $0x78] sm:$0xff]
      %v431 = vadd.f32 %v415, %v319
      %v432 = vadd.f32 %v416, %v320
      %v433 = vadd.f32 %v417, %v321
      %v434 = vadd.f32 %v418, %v322
      %v435 = vadd.f32 %v419, %v323
      %v436 = vadd.f32 %v420, %v324
      %v437 = vadd.f32 %v421, %v325
      %v438 = vadd.f32 %v422, %v326
      %v439 = vadd.f32 %v423, %v327
      %v440 = vadd.f32 %v424, %v328
      %v441 = vadd.f32 %v425, %v329
      %v442 = vadd.f32 %v426, %v330
      %v443 = vadd.f32 %v427, %v331
      %v444 = vadd.f32 %v428, %v332
      %v445 = vadd.f32 %v429, %v333
      %v446 = vadd.f32 %v430, %v334
      %v447 = vmul.f32 %v431, 0.25
      %v448 = vmul.f32 %v432, 0.25
      %v449 = vmul.f32 %v433, 0.25
      %v450 = vmul.f32 %v434, 0.25
      %v451 = vmul.f32 %v435, 0.25
      %v452 = vmul.f32 %v436, 0.25
      %v453 = vmul.f32 %v437, 0.25
      %v454 = vmul.f32 %v438, 0.25
      %v455 = vmul.f32 %v439, 0.25
      %v456 = vmul.f32 %v440, 0.25
      %v457 = vmul.f32 %v441, 0.25
      %v458 = vmul.f32 %v442, 0.25
      %v459 = vmul.f32 %v443, 0.25
      %v460 = vmul.f32 %v444, 0.25
      %v461 = vmul.f32 %v445, 0.25
      %v462 = vmul.f32 %v446, 0.25
      %463 = vst [vmem:[%s4] sm:$0xff] %v447
      %464 = vst [vmem:[%s4 + $0x8] sm:$0xff] %v448
      %465 = vst [vmem:[%s4 + $0x10] sm:$0xff] %v449
      %466 = vst [vmem:[%s4 + $0x18] sm:$0xff] %v450
      %467 = vst [vmem:[%s4 + $0x20] sm:$0xff] %v451
      %468 = vst [vmem:[%s4 + $0x28] sm:$0xff] %v452
      %469 = vst [vmem:[%s4 + $0x30] sm:$0xff] %v453
      %470 = vst [vmem:[%s4 + $0x38] sm:$0xff] %v454
      %471 = vst [vmem:[%s4 + $0x40] sm:$0xff] %v455
      %472 = vst [vmem:[%s4 + $0x48] sm:$0xff] %v456
      %473 = vst [vmem:[%s4 + $0x50] sm:$0xff] %v457
      %474 = vst [vmem:[%s4 + $0x58] sm:$0xff] %v458
      %475 = vst [vmem:[%s4 + $0x60] sm:$0xff] %v459
      %476 = vst [vmem:[%s4 + $0x68] sm:$0xff] %v460
      %477 = vst [vmem:[%s4 + $0x70] sm:$0xff] %v461
      %478 = vst [vmem:[%s4 + $0x78] sm:$0xff] %v462
    $region21: #{_propagate_bipartite.10} parent=1 // pred_fallthru
      _
    // Predicated region
    $region22: #{_propagate_bipartite.10} parent=1 // pred_check
      _
    $region23: #{_propagate_bipartite.10} parent=1 // pred_check_branch
      %480 = sbr.rel (0) target = $region25
    $region24: #{_propagate_bipartite.10} parent=1 // pred_region
      %s482 = ssub.s32 1024, 1024
      %483 = vsyncadd [#allocation4], %s482
      %s484 = sshll.u32 [#allocation3], 4
      %s485 = int_to_ptr.vmem [resolvable:$true] %s484
      %490 = dma.vmem_to_hbm [thread:$0]  %s485, 1024, %s3, [#allocation4], 64, 64, 4
    $region25: #{_propagate_bipartite.10} parent=1 // pred_fallthru
      _
    // Predicated region
    $region26: #{_propagate_bipartite.10} parent=1 // pred_check
      _
    $region27: #{_propagate_bipartite.10} parent=1 // pred_check_branch
      %492 = sbr.rel (0) target = $region29
    $region28: #{_propagate_bipartite.10} parent=1 // pred_region
      _
    $region29: #{_propagate_bipartite.10} parent=1 // pred_fallthru
      _
    // Predicated region
    $region30: #{_propagate_bipartite.10} parent=1 // pred_check
      _
    $region31: #{_propagate_bipartite.10} parent=1 // pred_check_branch
      %494 = sbr.rel (0) target = $region33
    $region32: #{_propagate_bipartite.10} parent=1 // pred_region
      %495 = dma.done [#allocation4], 1024
    $region33: #{_propagate_bipartite.10} parent=1 // pred_fallthru
      _
    // Predicated region
    $region34: #{_propagate_bipartite.10} parent=1 // pred_check
      _
    $region35: #{_propagate_bipartite.10} parent=1 // pred_check_branch
      %497 = sbr.rel (0) target = $region37
    $region36: #{_propagate_bipartite.10} parent=1 // pred_region
      _
    $region37: #{_propagate_bipartite.10} parent=1 // pred_fallthru
      _
    %498 = vsyncpa [#allocation4], 1

</llo_original>
